<compile_context>
chip_gen: v7x
topology: tpu7x:2x2x1
jax: 0.10.0
libtpu: 0.0.40
codegen_flags: <defaults>
</compile_context>

<pallas_src>
import jax
import jax.numpy as jnp
from jax import lax
from jax.experimental import pallas as pl
from jax.experimental.pallas import tpu as pltpu


def taxo_embed_kernel(tok_ids_ref,           # SMEM (B, S) int32  (scalar prefetch)
                      typ_ids_ref,           # VMEM (tile_s, 1) int32
                      tok_tab_hbm,           # HBM  (V, H)        (memory_space=pl.ANY)
                      typ_tab_ref,           # VMEM (T, H) resident
                      pos_ref,               # VMEM (tile_s, H)
                      gamma_ref, beta_ref,   # VMEM (1, H)
                      out_ref,               # VMEM (tile_s, H)
                      gbuf,                  # VMEM scratch (tile_s, H) table dtype
                      sems):                 # DMA semaphores (tile_s,)
    f32 = jnp.float32
    tile_s, H = out_ref.shape
    T = typ_tab_ref.shape[0]

    s = pl.program_id(0)
    b = pl.program_id(1)
    s0 = s * tile_s

    # --- token embedding: per-row DMA gather from HBM into VMEM staging ----
    @pl.loop(0, tile_s)
    def _start(i):
        row = tok_ids_ref[b, s0 + i]
        pltpu.make_async_copy(tok_tab_hbm.at[pl.ds(row, 1), :],
                              gbuf.at[pl.ds(i, 1), :],
                              sems.at[i]).start()

    @pl.loop(0, tile_s)
    def _wait(i):
        pltpu.make_async_copy(tok_tab_hbm.at[pl.ds(0, 1), :],
                              gbuf.at[pl.ds(i, 1), :],
                              sems.at[i]).wait()

    emb = gbuf[...].astype(f32)

    # --- type embedding: tiny one-hot matmul (T = type_embedding_max) ------
    typ_ids = typ_ids_ref[...]                                   # (tile_s, 1)
    iota_t = lax.broadcasted_iota(jnp.int32, (tile_s, T), 1)
    onehot_t = (iota_t == typ_ids).astype(typ_tab_ref.dtype)
    emb = emb + jnp.dot(onehot_t, typ_tab_ref[...], preferred_element_type=f32)

    # --- position embedding (static arange gather via BlockSpec DMA) -------
    emb = emb + pos_ref[...].astype(f32)

    # --- single-pass LayerNorm over the hidden axis (torch eps = 1e-5) -----
    mean = jnp.mean(emb, axis=-1, keepdims=True)
    meansq = jnp.mean(emb * emb, axis=-1, keepdims=True)
    var = meansq - mean * mean
    normed = (emb - mean) * lax.rsqrt(var + 1e-5)

    out_ref[...] = (normed * gamma_ref[...].astype(f32)
                    + beta_ref[...].astype(f32)).astype(out_ref.dtype)


def _pick_tile_s(S, max_tile_s):
    """Largest sequence tile <= max_tile_s that divides S and is a multiple
    of 8 (or equals S, which is always legal as a full-extent block)."""
    best = S
    for cand in range(min(S, max_tile_s), 0, -1):
        if S % cand == 0 and (cand % 8 == 0 or cand == S):
            best = cand
            break
    return best


def taxo_embedding(token_ids, type_ids, tok_tab, typ_tab, pos_tab, gamma, beta,
                   *, max_tile_s=256, out_dtype=jnp.float32):
    B, S = token_ids.shape
    V, H = tok_tab.shape
    T = typ_tab.shape[0]
    P = pos_tab.shape[0]
    assert S <= P, f"sequence length {S} exceeds pos_embedding_max {P}"

    N = B * S
    tile_s = _pick_tile_s(S, max_tile_s)
    n_s = S // tile_s

    tok_ids = token_ids.astype(jnp.int32)                  # (B, S) -> SMEM prefetch
    typ_ids_f = type_ids.astype(jnp.int32).reshape(N, 1)   # (N, 1) VMEM tiles
    pos_tab_s = pos_tab[:S]                                 # only the first S rows
    gamma2 = gamma.reshape(1, H)
    beta2 = beta.reshape(1, H)

    out = pl.pallas_call(
        taxo_embed_kernel,
        out_shape=jax.ShapeDtypeStruct((N, H), out_dtype),
        grid_spec=pltpu.PrefetchScalarGridSpec(
            num_scalar_prefetch=1,
            # s outer, B inner: the pos block index depends only on s, so it
            # stays resident across the inner batch loop (no re-fetch).
            grid=(n_s, B),
            in_specs=[
                pl.BlockSpec((tile_s, 1), lambda s, b, tok: (b * n_s + s, 0)),  # type ids
                pl.BlockSpec(memory_space=pl.ANY),                              # token table (HBM)
                pl.BlockSpec((T, H), lambda s, b, tok: (0, 0)),                 # type table (resident)
                pl.BlockSpec((tile_s, H), lambda s, b, tok: (s, 0)),            # position rows
                pl.BlockSpec((1, H), lambda s, b, tok: (0, 0)),                 # LN gamma
                pl.BlockSpec((1, H), lambda s, b, tok: (0, 0)),                 # LN beta
            ],
            out_specs=pl.BlockSpec((tile_s, H), lambda s, b, tok: (b * n_s + s, 0)),
            scratch_shapes=[
                pltpu.VMEM((tile_s, H), tok_tab.dtype),     # token-row staging buffer
                pltpu.SemaphoreType.DMA((tile_s,)),          # one sem per gathered row
            ],
        ),
        compiler_params=pltpu.CompilerParams(
            dimension_semantics=("parallel", "parallel")),
    )(tok_ids, typ_ids_f, tok_tab, typ_tab, pos_tab_s, gamma2, beta2)

    return out.reshape(B, S, H)


def reference(token_ids, type_ids, tok_tab, typ_tab, pos_tab, gamma, beta):
    S = token_ids.shape[-1]
    emb = (tok_tab[token_ids]
           + typ_tab[type_ids]
           + pos_tab[jnp.arange(S)][None, :, :])
    mean = jnp.mean(emb, axis=-1, keepdims=True)
    var = jnp.mean((emb - mean) ** 2, axis=-1, keepdims=True)
    return (emb - mean) * lax.rsqrt(var + 1e-5) * gamma + beta


if __name__ == "__main__":
    B, S, H = 2, 8, 32
    VOCAB = 64                 # token_embedding num_embeddings
    TYPE_MAX = 4               # type_embedding_max
    POS_MAX = 16               # pos_embedding_max (>= S)

    key = jax.random.PRNGKey(0)
    k_tok, k_typ, k_pos, k_ids, k_tids = jax.random.split(key, 5)

    # Deterministic parameter init (matches torch nn.Embedding ~N(0,1),
    # nn.LayerNorm weight=1 / bias=0 defaults).
    tok_tab = jax.random.normal(k_tok, (VOCAB, H), dtype=jnp.float32)
    typ_tab = jax.random.normal(k_typ, (TYPE_MAX, H), dtype=jnp.float32)
    pos_tab = jax.random.normal(k_pos, (POS_MAX, H), dtype=jnp.float32)
    gamma = jnp.ones((H,), dtype=jnp.float32)
    beta = jnp.zeros((H,), dtype=jnp.float32)

    token_ids = jax.random.randint(k_ids, (B, S), 0, VOCAB, dtype=jnp.int32)
    type_ids = jax.random.randint(k_tids, (B, S), 0, TYPE_MAX, dtype=jnp.int32)

    out = taxo_embedding(token_ids, type_ids, tok_tab, typ_tab, pos_tab,
                         gamma, beta)
    out = jax.block_until_ready(out)

    ref = reference(token_ids, type_ids, tok_tab, typ_tab, pos_tab,
                    gamma.reshape(1, 1, H), beta.reshape(1, 1, H))
    assert out.shape == (B, S, H)
    assert jnp.allclose(out, ref, atol=1e-4, rtol=1e-4)

    print("KERNEL_OK")
</pallas_src>

<mosaic_0001>
module attributes {stable_mosaic.version = 11 : i64} {
  func.func @taxo_embed_kernel(%arg0: i32, %arg1: i32, %arg2: memref<2x8xi32, #tpu.memory_space<smem>>, %arg3: memref<8x1xi32, #tpu.memory_space<vmem>>, %arg4: memref<64x32xf32, #tpu.memory_space<any>>, %arg5: memref<4x32xf32, #tpu.memory_space<vmem>>, %arg6: memref<8x32xf32, #tpu.memory_space<vmem>>, %arg7: memref<1x32xf32, #tpu.memory_space<vmem>>, %arg8: memref<1x32xf32, #tpu.memory_space<vmem>>, %arg9: memref<8x32xf32, #tpu.memory_space<vmem>>, %arg10: memref<8x32xf32, #tpu.memory_space<vmem>>, %arg11: memref<8x!tpu.dma_semaphore, #tpu.memory_space<semaphore_mem>>) attributes {dimension_semantics = [#tpu.dimension_semantics<parallel>, #tpu.dimension_semantics<parallel>], iteration_bounds = array<i64: 1, 2>, scalar_prefetch = 1 : i64, scratch_operands = 2 : i64, tpu.core_type = #tpu.core_type<tc>, window_params = [{transform_indices = @transform_0, window_bounds = array<i64: 8, 1>}, {}, {pipeline_mode = #tpu.pipeline_mode<synchronous>, transform_indices = @transform_2, window_bounds = array<i64: 4, 32>}, {transform_indices = @transform_3, window_bounds = array<i64: 8, 32>}, {pipeline_mode = #tpu.pipeline_mode<synchronous>, transform_indices = @transform_4, window_bounds = array<i64: 1, 32>}, {pipeline_mode = #tpu.pipeline_mode<synchronous>, transform_indices = @transform_5, window_bounds = array<i64: 1, 32>}, {transform_indices = @transform_6, window_bounds = array<i64: 8, 32>}]} {
    %c8_i32 = arith.constant 8 : i32
    %0 = arith.muli %arg0, %c8_i32 : i32
    %c0_i32 = arith.constant 0 : i32
    %c8_i32_0 = arith.constant 8 : i32
    %1 = arith.addi %c0_i32, %c8_i32_0 : i32
    %c1_i32 = arith.constant 1 : i32
    scf.for %arg12 = %c0_i32 to %1 step %c1_i32  : i32 {
      %c1_i32_24 = arith.constant 1 : i32
      %40 = arith.muli %arg12, %c1_i32_24 : i32
      %c0_i32_25 = arith.constant 0 : i32
      %41 = arith.addi %c0_i32_25, %40 : i32
      %42 = arith.addi %0, %41 : i32
      %43 = arith.index_cast %arg1 : i32 to index
      %44 = arith.index_cast %42 : i32 to index
      %45 = memref.load %arg2[%43, %44] : memref<2x8xi32, #tpu.memory_space<smem>>
      %c0_i32_26 = arith.constant 0 : i32
      %46 = tpu.memref_slice %arg4[%45, %c0_i32_26] : memref<64x32xf32, #tpu.memory_space<any>> -> memref<1x32xf32, #tpu.memory_space<any>>
      %c0_i32_27 = arith.constant 0 : i32
      %47 = tpu.memref_slice %arg10[%41, %c0_i32_27] : memref<8x32xf32, #tpu.memory_space<vmem>> -> memref<1x32xf32, #tpu.memory_space<vmem>>
      %48 = tpu.memref_slice %arg11[%41] : memref<8x!tpu.dma_semaphore, #tpu.memory_space<semaphore_mem>> -> memref<1x!tpu.dma_semaphore, #tpu.memory_space<semaphore_mem>>
      %49 = tpu.memref_squeeze %48 : memref<1x!tpu.dma_semaphore, #tpu.memory_space<semaphore_mem>> -> memref<!tpu.dma_semaphore, #tpu.memory_space<semaphore_mem>>
      tpu.enqueue_dma source(%46 : memref<1x32xf32, #tpu.memory_space<any>>) target(%47 : memref<1x32xf32, #tpu.memory_space<vmem>>) target_semaphore(%49 : memref<!tpu.dma_semaphore, #tpu.memory_space<semaphore_mem>>)
    }
    %c8_i32_1 = arith.constant 8 : i32
    %c0_i32_2 = arith.constant 0 : i32
    %c8_i32_3 = arith.constant 8 : i32
    %2 = arith.addi %c0_i32_2, %c8_i32_3 : i32
    %c1_i32_4 = arith.constant 1 : i32
    scf.for %arg12 = %c0_i32_2 to %2 step %c1_i32_4  : i32 {
      %c1_i32_24 = arith.constant 1 : i32
      %40 = arith.muli %arg12, %c1_i32_24 : i32
      %c0_i32_25 = arith.constant 0 : i32
      %41 = arith.addi %c0_i32_25, %40 : i32
      %c0_i32_26 = arith.constant 0 : i32
      %c0_i32_27 = arith.constant 0 : i32
      %42 = tpu.memref_slice %arg4[%c0_i32_26, %c0_i32_27] : memref<64x32xf32, #tpu.memory_space<any>> -> memref<1x32xf32, #tpu.memory_space<any>>
      %c0_i32_28 = arith.constant 0 : i32
      %43 = tpu.memref_slice %arg10[%41, %c0_i32_28] : memref<8x32xf32, #tpu.memory_space<vmem>> -> memref<1x32xf32, #tpu.memory_space<vmem>>
      %44 = tpu.memref_slice %arg11[%41] : memref<8x!tpu.dma_semaphore, #tpu.memory_space<semaphore_mem>> -> memref<1x!tpu.dma_semaphore, #tpu.memory_space<semaphore_mem>>
      %45 = tpu.memref_squeeze %44 : memref<1x!tpu.dma_semaphore, #tpu.memory_space<semaphore_mem>> -> memref<!tpu.dma_semaphore, #tpu.memory_space<semaphore_mem>>
      tpu.wait_dma2 semaphore(%45 : memref<!tpu.dma_semaphore, #tpu.memory_space<semaphore_mem>>) src(%42 : memref<1x32xf32, #tpu.memory_space<any>>) dst(%43 : memref<1x32xf32, #tpu.memory_space<vmem>>)
    }
    %c8_i32_5 = arith.constant 8 : i32
    %c0 = arith.constant 0 : index
    %c0_6 = arith.constant 0 : index
    %3 = vector.load %arg10[%c0, %c0_6] : memref<8x32xf32, #tpu.memory_space<vmem>>, vector<8x32xf32>
    %c0_7 = arith.constant 0 : index
    %c0_8 = arith.constant 0 : index
    %4 = vector.load %arg3[%c0_7, %c0_8] : memref<8x1xi32, #tpu.memory_space<vmem>>, vector<8x1xi32>
    %5 = tpu.iota {dimensions = array<i32: 1>} : vector<8x4xi32>
    %6 = vector.broadcast %4 : vector<8x1xi32> to vector<8x4xi32>
    %7 = arith.cmpi eq, %5, %6 : vector<8x4xi32>
    %8 = arith.extui %7 : vector<8x4xi1> to vector<8x4xi32>
    %9 = arith.sitofp %8 : vector<8x4xi32> to vector<8x4xf32>
    %c0_9 = arith.constant 0 : index
    %c0_10 = arith.constant 0 : index
    %10 = vector.load %arg5[%c0_9, %c0_10] : memref<4x32xf32, #tpu.memory_space<vmem>>, vector<4x32xf32>
    %cst = arith.constant dense<0.000000e+00> : vector<8x32xf32>
    %11 = tpu.matmul %9, %10, %cst {dimension_numbers = #tpu.dot_dimension_numbers<[1], [0], [0], [1], [0, 0, 1, 1], [], []>} : vector<8x4xf32>, vector<4x32xf32>, vector<8x32xf32> -> vector<8x32xf32>
    %12 = arith.addf %3, %11 : vector<8x32xf32>
    %c0_11 = arith.constant 0 : index
    %c0_12 = arith.constant 0 : index
    %13 = vector.load %arg6[%c0_11, %c0_12] : memref<8x32xf32, #tpu.memory_space<vmem>>, vector<8x32xf32>
    %14 = arith.addf %12, %13 : vector<8x32xf32>
    %cst_13 = arith.constant dense<0.000000e+00> : vector<8xf32>
    %15 = vector.multi_reduction <add>, %14, %cst_13 [1] : vector<8x32xf32> to vector<8xf32>
    %16 = vector.shape_cast %15 : vector<8xf32> to vector<8x1xf32>
    %cst_14 = arith.constant 3.200000e+01 : f32
    %17 = vector.broadcast %cst_14 : f32 to vector<8x1xf32>
    %18 = arith.divf %16, %17 : vector<8x1xf32>
    %19 = arith.mulf %14, %14 : vector<8x32xf32>
    %cst_15 = arith.constant dense<0.000000e+00> : vector<8xf32>
    %20 = vector.multi_reduction <add>, %19, %cst_15 [1] : vector<8x32xf32> to vector<8xf32>
    %21 = vector.shape_cast %20 : vector<8xf32> to vector<8x1xf32>
    %cst_16 = arith.constant 3.200000e+01 : f32
    %22 = vector.broadcast %cst_16 : f32 to vector<8x1xf32>
    %23 = arith.divf %21, %22 : vector<8x1xf32>
    %24 = arith.mulf %18, %18 : vector<8x1xf32>
    %25 = arith.subf %23, %24 : vector<8x1xf32>
    %26 = vector.broadcast %18 : vector<8x1xf32> to vector<8x32xf32>
    %27 = arith.subf %14, %26 : vector<8x32xf32>
    %cst_17 = arith.constant 9.99999974E-6 : f32
    %28 = vector.broadcast %cst_17 : f32 to vector<8x1xf32>
    %29 = arith.addf %25, %28 : vector<8x1xf32>
    %30 = math.rsqrt %29 : vector<8x1xf32>
    %31 = vector.broadcast %30 : vector<8x1xf32> to vector<8x32xf32>
    %32 = arith.mulf %27, %31 : vector<8x32xf32>
    %c0_18 = arith.constant 0 : index
    %c0_19 = arith.constant 0 : index
    %33 = vector.load %arg7[%c0_18, %c0_19] : memref<1x32xf32, #tpu.memory_space<vmem>>, vector<1x32xf32>
    %34 = vector.broadcast %33 : vector<1x32xf32> to vector<8x32xf32>
    %35 = arith.mulf %32, %34 : vector<8x32xf32>
    %c0_20 = arith.constant 0 : index
    %c0_21 = arith.constant 0 : index
    %36 = vector.load %arg8[%c0_20, %c0_21] : memref<1x32xf32, #tpu.memory_space<vmem>>, vector<1x32xf32>
    %37 = vector.broadcast %36 : vector<1x32xf32> to vector<8x32xf32>
    %38 = arith.addf %35, %37 : vector<8x32xf32>
    %c0_22 = arith.constant 0 : index
    %c0_23 = arith.constant 0 : index
    %39 = vector.load %arg9[%c0_22, %c0_23] : memref<8x32xf32, #tpu.memory_space<vmem>>, vector<8x32xf32>
    tpu.vector_store %arg9[%c0_22, %c0_23], %38 {strides = array<i32>} : memref<8x32xf32, #tpu.memory_space<vmem>>, vector<8x32xf32>,
    return
  }
  func.func @transform_0(%arg0: i32, %arg1: i32, %arg2: memref<2x8xi32, #tpu.memory_space<smem>>) -> (i32, i32) {
    %c1_i32 = arith.constant 1 : i32
    %0 = arith.muli %arg1, %c1_i32 : i32
    %1 = arith.addi %0, %arg0 : i32
    %c0_i32 = arith.constant 0 : i32
    %c0_i32_0 = arith.constant 0 : i32
    return %1, %c0_i32 : i32, i32
  }
  func.func @transform_2(%arg0: i32, %arg1: i32, %arg2: memref<2x8xi32, #tpu.memory_space<smem>>) -> (i32, i32) {
    %c0_i32 = arith.constant 0 : i32
    %c0_i32_0 = arith.constant 0 : i32
    %c0_i32_1 = arith.constant 0 : i32
    return %c0_i32, %c0_i32_0 : i32, i32
  }
  func.func @transform_3(%arg0: i32, %arg1: i32, %arg2: memref<2x8xi32, #tpu.memory_space<smem>>) -> (i32, i32) {
    %c0_i32 = arith.constant 0 : i32
    %c0_i32_0 = arith.constant 0 : i32
    return %arg0, %c0_i32 : i32, i32
  }
  func.func @transform_4(%arg0: i32, %arg1: i32, %arg2: memref<2x8xi32, #tpu.memory_space<smem>>) -> (i32, i32) {
    %c0_i32 = arith.constant 0 : i32
    %c0_i32_0 = arith.constant 0 : i32
    %c0_i32_1 = arith.constant 0 : i32
    return %c0_i32, %c0_i32_0 : i32, i32
  }
  func.func @transform_5(%arg0: i32, %arg1: i32, %arg2: memref<2x8xi32, #tpu.memory_space<smem>>) -> (i32, i32) {
    %c0_i32 = arith.constant 0 : i32
    %c0_i32_0 = arith.constant 0 : i32
    %c0_i32_1 = arith.constant 0 : i32
    return %c0_i32, %c0_i32_0 : i32, i32
  }
  func.func @transform_6(%arg0: i32, %arg1: i32, %arg2: memref<2x8xi32, #tpu.memory_space<smem>>) -> (i32, i32) {
    %c1_i32 = arith.constant 1 : i32
    %0 = arith.muli %arg1, %c1_i32 : i32
    %1 = arith.addi %0, %arg0 : i32
    %c0_i32 = arith.constant 0 : i32
    %c0_i32_0 = arith.constant 0 : i32
    return %1, %c0_i32 : i32, i32
  }
}

</mosaic_0001>

<llo_original>
// kernel: tpu_custom_call.1
$region0: #{tpu_custom_call.1}
  #allocation0 [shape = 'u32[]', space=smem, size = 0x4, offset = 0x4, fixed_abs, tag = 'smem constant byte address 0x4 - core index']
  #allocation1 [shape = 'u32[144,128]{1,0:T(1,128)}', space=vmem, size = 0x12000, scoped, tag = 'internal scratch']
  #allocation2 [shape = 'f32[8,32]{1,0:T(8,128)}', space=vmem, size = 0x1000, scoped, tag = 'scratch operand']
  #allocation3 [shape = 's32[8]{0}', space=sflag, size = 0x20, scoped, tag = 'scratch operand']
  #allocation4 [shape = 's32[1]{0}', space=sflag, size = 0x4, scoped, tag = 'scoped memory for tpu_custom_call.1']
  #allocation5 [shape = 'u8[1024]{0}', space=smem, size = 0x400, scoped, tag = 'prefetched SMEM operand 0']
  #allocation8 [shape = 's32[]', space=sflag, size = 0x4, offset = 0, fixed_abs, tag = 'sflag constant byte address 0x0 - dummy sync flag']
  %s0 = inlined_call_operand.vmem [shape: s32[2,8], index: 0, kind: input, shape index: {}]
  %s1 = inlined_call_operand.vmem [shape: s32[16,1], index: 1, kind: input, shape index: {}]
  %s2 = inlined_call_operand.vmem [shape: f32[64,32], index: 2, kind: input, shape index: {}]
  %s3 = inlined_call_operand.vmem [shape: f32[4,32], index: 3, kind: input, shape index: {}]
  %s4 = inlined_call_operand.vmem [shape: f32[8,32], index: 4, kind: input, shape index: {}]
  %s5 = inlined_call_operand.vmem [shape: f32[1,32], index: 5, kind: input, shape index: {}]
  %s6 = inlined_call_operand.vmem [shape: f32[1,32], index: 6, kind: input, shape index: {}]
  %s7 = inlined_call_operand.hbm [shape: f32[16,32], index: 7, kind: output, shape index: {}]
  %s8 = sld [smem:[#allocation0]]
  $region97: #{tpu_custom_call.1} parent=0
    _
  %s10 = ssub.s32 1, %s8
  %s11 = scalar_select 0, %s10, %s8
  %s12 = sshll.u32 %s0, 4
  %s13 = int_to_ptr.vmem [resolvable:$true] %s12
  %15 = dma.vmem_to_smem %s13, 32, [#allocation5], [#allocation4]
  %16 = dma.done [#allocation4], 32
  %17 = sfence
  $region1: #{tpu_custom_call.1} parent=0
    #allocation6 [shape = 'u8[8192]{0}', space=vmem, size = 0x2000, scoped, tag = 'output window, operand 0']
    #allocation7 [shape = 's32[2]{0}', space=sflag, size = 0x8, scoped, tag = 'scoped memory for tpu_custom_call.1']
    %18 = vsyncpa [#allocation7], 0
    %s19 = scalar_lea.sflag [#allocation7], 1
    %20 = vsyncpa %s19, 0
    loop: start=0, step=1, limit=4
    $region2: #{tpu_custom_call.1} parent=1 // loop_pre_header
      _
    $region3: #{tpu_custom_call.1} parent=1 // loop_header
      %s22 = sphi 0, %s26
      %p23 = scmp.ge.s32.totalorder %s22, 4
      %s29 = sphi 0, %s41
      %s30 = sphi 0, %s37
      %s31 = sphi 0, %s29
      %s32 = sphi 0, %s30
      %s33 = sphi 0, %s31
      %s34 = sphi 0, %s32
      %s46 = sphi 0, %s48
      %s49 = sphi 0, %s46
      %s50 = sphi 0, %s49
      %s66 = sphi 0, %s50
      %s70 = sphi 0, %s70
      %s72 = sphi 0, %s70
      %s73 = sphi 0, %s72
      %s87 = sphi 0, %s73
      %s93 = sphi 0, %s95
      %s96 = sphi 0, %s93
      %s97 = sphi 0, %s96
      %s113 = sphi 0, %s97
      %s117 = sphi 0, %s117
      %s119 = sphi 0, %s117
      %s120 = sphi 0, %s119
      %s134 = sphi 0, %s120
      %s138 = sphi 0, %s138
      %s140 = sphi 0, %s138
      %s141 = sphi 0, %s140
      %s155 = sphi 0, %s141
      %s163 = sphi 0, %s165
      %s166 = sphi 0, %s163
      %s167 = sphi 0, %s166
      %s183 = sphi 0, %s167
    $region4: #{tpu_custom_call.1} parent=1 // loop_header_branch
      %25 = sbr.rel (%p23) target = $region8
    $region5: #{tpu_custom_call.1} parent=1 // loop_body
      %s27 = ssub.s32 %s22, 1
      %s28 = ssub.s32 %s22, 2
      %s35 = sadd.s32 1, %s30
      %p36 = scmp.ge.s32.totalorder %s35, 2
      %s37 = scalar_select %p36, 0, %s35
      %s38 = sadd.s32 1, %s29
      %s39 = scalar_select %p36, %s38, %s29
      %p40 = scmp.ge.s32.totalorder %s39, 1
      %s41 = scalar_select %p40, 0, %s39
      %s42 = sadd.s32 %s30, %s29
      %s43 = sadd.s32 %s37, %s41
      %s44 = ssub.s32 %s42, %s43
      %p45 = scmp.eq.s32.totalorder %s44, 0
      %s47 = sadd.s32 %s46, 1
      %s48 = scalar_select %p45, %s46, %s47
      %p51 = pneg %p45
      %p52 = scmp.eq.s32.totalorder %s22, 1
      %p53 = por %p51, %p52
      %p54 = scmp.ne.s32.totalorder %s46, %s49
      %p55 = scmp.eq.s32.totalorder %s22, 0
      %p56 = por %p54, %p55
      %p57 = scmp.ne.s32.totalorder %s46, %s49
      %p58 = scmp.eq.s32.totalorder %s27, 1
      %p59 = por %p57, %p58
      %p60 = scmp.ne.s32.totalorder %s49, %s50
      %p61 = scmp.eq.s32.totalorder %s27, 0
      %p62 = por %p60, %p61
      %p63 = scmp.ne.s32.totalorder %s49, %s50
      %p64 = scmp.eq.s32.totalorder %s28, 1
      %p65 = por %p63, %p64
      %p67 = scmp.ne.s32.totalorder %s50, %s66
      %p68 = scmp.eq.s32.totalorder %s28, 0
      %p69 = por %p67, %p68
      %s71 = sadd.s32 %s70, 1
      %p74 = scmp.eq.s32.totalorder %s22, 1
      %p75 = scmp.ne.s32.totalorder %s70, %s72
      %p76 = scmp.eq.s32.totalorder %s22, 0
      %p77 = por %p75, %p76
      %p78 = scmp.ne.s32.totalorder %s70, %s72
      %p79 = scmp.eq.s32.totalorder %s27, 1
      %p80 = por %p78, %p79
      %p81 = scmp.ne.s32.totalorder %s72, %s73
      %p82 = scmp.eq.s32.totalorder %s27, 0
      %p83 = por %p81, %p82
      %p84 = scmp.ne.s32.totalorder %s72, %s73
      %p85 = scmp.eq.s32.totalorder %s28, 1
      %p86 = por %p84, %p85
      %p88 = scmp.ne.s32.totalorder %s73, %s87
      %p89 = scmp.eq.s32.totalorder %s28, 0
      %p90 = por %p88, %p89
      %s91 = ssub.s32 %s29, %s41
      %p92 = scmp.eq.s32.totalorder %s91, 0
      %s94 = sadd.s32 %s93, 1
      %s95 = scalar_select %p92, %s93, %s94
      %p98 = pneg %p92
      %p99 = scmp.eq.s32.totalorder %s22, 1
      %p100 = por %p98, %p99
      %p101 = scmp.ne.s32.totalorder %s93, %s96
      %p102 = scmp.eq.s32.totalorder %s22, 0
      %p103 = por %p101, %p102
      %p104 = scmp.ne.s32.totalorder %s93, %s96
      %p105 = scmp.eq.s32.totalorder %s27, 1
      %p106 = por %p104, %p105
      %p107 = scmp.ne.s32.totalorder %s96, %s97
      %p108 = scmp.eq.s32.totalorder %s27, 0
      %p109 = por %p107, %p108
      %p110 = scmp.ne.s32.totalorder %s96, %s97
      %p111 = scmp.eq.s32.totalorder %s28, 1
      %p112 = por %p110, %p111
      %p114 = scmp.ne.s32.totalorder %s97, %s113
      %p115 = scmp.eq.s32.totalorder %s28, 0
      %p116 = por %p114, %p115
      %s118 = sadd.s32 %s117, 1
      %p121 = scmp.eq.s32.totalorder %s22, 1
      %p122 = scmp.ne.s32.totalorder %s117, %s119
      %p123 = scmp.eq.s32.totalorder %s22, 0
      %p124 = por %p122, %p123
      %p125 = scmp.ne.s32.totalorder %s117, %s119
      %p126 = scmp.eq.s32.totalorder %s27, 1
      %p127 = por %p125, %p126
      %p128 = scmp.ne.s32.totalorder %s119, %s120
      %p129 = scmp.eq.s32.totalorder %s27, 0
      %p130 = por %p128, %p129
      %p131 = scmp.ne.s32.totalorder %s119, %s120
      %p132 = scmp.eq.s32.totalorder %s28, 1
      %p133 = por %p131, %p132
      %p135 = scmp.ne.s32.totalorder %s120, %s134
      %p136 = scmp.eq.s32.totalorder %s28, 0
      %p137 = por %p135, %p136
      %s139 = sadd.s32 %s138, 1
      %p142 = scmp.eq.s32.totalorder %s22, 1
      %p143 = scmp.ne.s32.totalorder %s138, %s140
      %p144 = scmp.eq.s32.totalorder %s22, 0
      %p145 = por %p143, %p144
      %p146 = scmp.ne.s32.totalorder %s138, %s140
      %p147 = scmp.eq.s32.totalorder %s27, 1
      %p148 = por %p146, %p147
      %p149 = scmp.ne.s32.totalorder %s140, %s141
      %p150 = scmp.eq.s32.totalorder %s27, 0
      %p151 = por %p149, %p150
      %p152 = scmp.ne.s32.totalorder %s140, %s141
      %p153 = scmp.eq.s32.totalorder %s28, 1
      %p154 = por %p152, %p153
      %p156 = scmp.ne.s32.totalorder %s141, %s155
      %p157 = scmp.eq.s32.totalorder %s28, 0
      %p158 = por %p156, %p157
      %s159 = sadd.s32 %s30, %s29
      %s160 = sadd.s32 %s37, %s41
      %s161 = ssub.s32 %s159, %s160
      %p162 = scmp.eq.s32.totalorder %s161, 0
      %s164 = sadd.s32 %s163, 1
      %s165 = scalar_select %p162, %s163, %s164
      %p168 = pneg %p162
      %p169 = scmp.eq.s32.totalorder %s22, 1
      %p170 = por %p168, %p169
      %p171 = scmp.ne.s32.totalorder %s163, %s166
      %p172 = scmp.eq.s32.totalorder %s22, 0
      %p173 = por %p171, %p172
      %p174 = scmp.ne.s32.totalorder %s163, %s166
      %p175 = scmp.eq.s32.totalorder %s27, 1
      %p176 = por %p174, %p175
      %p177 = scmp.ne.s32.totalorder %s166, %s167
      %p178 = scmp.eq.s32.totalorder %s27, 0
      %p179 = por %p177, %p178
      %p180 = scmp.ne.s32.totalorder %s166, %s167
      %p181 = scmp.eq.s32.totalorder %s28, 1
      %p182 = por %p180, %p181
      %p184 = scmp.ne.s32.totalorder %s167, %s183
      %p185 = scmp.eq.s32.totalorder %s28, 0
      %p186 = por %p184, %p185
      %p187 = scmp.le.s32.totalorder 1, %s22
      %p188 = scmp.lt.s32.totalorder %s22, 3
      %p189 = pnand %p187, %p188
      %p190 = pneg %p189
      // Predicated region
      $region9: #{tpu_custom_call.1} parent=5 // pred_check
        _
      $region10: #{tpu_custom_call.1} parent=5 // pred_check_branch
        %192 = sbr.rel (%p189) target = $region12
      $region11: #{tpu_custom_call.1} parent=5 // pred_region
        %s193 = ssub.s32 %s22, 1
        // Predicated region
        $region13: #{tpu_custom_call.1} parent=11 // pred_check
          %p194 = pneg %p83
        $region14: #{tpu_custom_call.1} parent=11 // pred_check_branch
          %196 = sbr.rel (%p194) target = $region16
        $region15: #{tpu_custom_call.1} parent=11 // pred_region
          _
        $region16: #{tpu_custom_call.1} parent=11 // pred_fallthru
          _
        // Predicated region
        $region17: #{tpu_custom_call.1} parent=11 // pred_check
          %p197 = pneg %p109
        $region18: #{tpu_custom_call.1} parent=11 // pred_check_branch
          %199 = sbr.rel (%p197) target = $region20
        $region19: #{tpu_custom_call.1} parent=11 // pred_region
          %p200 = scmp.lt.s32.totalorder %s31, 0
          %s201 = scalar_select %p200, %s31, 0
          %s202 = smul.addr %s201, 8
          %s203 = scalar_lea.vmem %s4, %s202
        $region20: #{tpu_custom_call.1} parent=11 // pred_fallthru
          _
        // Predicated region
        $region21: #{tpu_custom_call.1} parent=11 // pred_check
          %p204 = pneg %p130
        $region22: #{tpu_custom_call.1} parent=11 // pred_check_branch
          %206 = sbr.rel (%p204) target = $region24
        $region23: #{tpu_custom_call.1} parent=11 // pred_region
          _
        $region24: #{tpu_custom_call.1} parent=11 // pred_fallthru
          _
        // Predicated region
        $region25: #{tpu_custom_call.1} parent=11 // pred_check
          %p207 = pneg %p151
        $region26: #{tpu_custom_call.1} parent=11 // pred_check_branch
          %209 = sbr.rel (%p207) target = $region28
        $region27: #{tpu_custom_call.1} parent=11 // pred_region
          _
        $region28: #{tpu_custom_call.1} parent=11 // pred_fallthru
          _
      $region12: #{tpu_custom_call.1} parent=5 // pred_fallthru
        _
      %p210 = scmp.lt.s32.totalorder %s22, 2
      // Predicated region
      $region29: #{tpu_custom_call.1} parent=5 // pred_check
        %p211 = pneg %p210
      $region30: #{tpu_custom_call.1} parent=5 // pred_check_branch
        %213 = sbr.rel (%p211) target = $region32
      $region31: #{tpu_custom_call.1} parent=5 // pred_region
        // Predicated region
        $region33: #{tpu_custom_call.1} parent=31 // pred_check
          %p214 = pneg %p56
        $region34: #{tpu_custom_call.1} parent=31 // pred_check_branch
          %216 = sbr.rel (%p214) target = $region36
        $region35: #{tpu_custom_call.1} parent=31 // pred_region
          %s217 = sadd.s32 %s30, %s29
          %p218 = scmp.lt.s32.totalorder %s217, 1
          %s219 = scalar_select %p218, %s217, 1
          %s220 = smul.addr %s219, 8
          %s221 = scalar_lea.vmem %s1, %s220
          %s222 = sadd.s32 %s30, %s29
        $region36: #{tpu_custom_call.1} parent=31 // pred_fallthru
          _
      $region32: #{tpu_custom_call.1} parent=5 // pred_fallthru
        _
      %p223 = scmp.le.s32.totalorder 1, %s22
      %p224 = scmp.lt.s32.totalorder %s22, 3
      %p225 = pnand %p223, %p224
      %p226 = pneg %p225
      // Predicated region
      $region37: #{tpu_custom_call.1} parent=5 // pred_check
        _
      $region38: #{tpu_custom_call.1} parent=5 // pred_check_branch
        %228 = sbr.rel (%p225) target = $region40
      $region39: #{tpu_custom_call.1} parent=5 // pred_region
        %s229 = ssub.s32 %s22, 1
        %s230 = sadd.s32 %s32, %s31
        %p231 = scmp.lt.s32.totalorder %s230, 1
        %s232 = scalar_select %p231, %s230, 1
        %s233 = smul.addr %s232, 8
        %s234 = scalar_lea.vmem %s1, %s233
        %p235 = pneg %p62
        %p236 = pneg %p59
        %p237 = pneg %p83
        %p238 = pneg %p80
        %p239 = scmp.lt.s32.totalorder %s31, 0
        %s240 = scalar_select %p239, %s31, 0
        %s241 = smul.addr %s240, 8
        %s242 = scalar_lea.vmem %s4, %s241
        %p243 = pneg %p109
        %p244 = pneg %p106
        %p245 = pneg %p130
        %p246 = pneg %p127
        %p247 = pneg %p151
        %p248 = pneg %p148
        %p249 = pneg %p179
        %p250 = pneg %p176
        %s251 = sand.u32 %s166, 1
        %s252 = scalar_lea.sflag [#allocation7], %s251
        %s253 = sand.u32 %s166, 1
        %s254 = smul.addr %s253, 8
        %s255 = scalar_lea.vmem [#allocation6], %s254
        %s256 = sadd.s32 %s32, %s31
        %p257 = scmp.lt.s32.totalorder %s256, 1
        %s258 = scalar_select %p257, %s256, 1
        %s259 = smul.addr %s258, 8
        %s260 = scalar_lea.vmem %s1, %s259
        %s261 = sadd.s32 %s32, %s31
        %p262 = scmp.lt.s32.totalorder %s31, 0
        %s263 = scalar_select %p262, %s31, 0
        %s264 = smul.addr %s263, 8
        %s265 = scalar_lea.vmem %s4, %s264
        %s266 = sadd.s32 %s32, %s31
        %s267 = smul.u32 %s31, 8
        loop: start=0, step=1, limit=8
        $region41: #{tpu_custom_call.1} parent=39 // loop_pre_header
          _
        $region42: #{tpu_custom_call.1} parent=39 // loop_header
          %s269 = sphi 0, %s273
          %p270 = scmp.ge.s32.totalorder %s269, 8
        $region43: #{tpu_custom_call.1} parent=39 // loop_header_branch
          %272 = sbr.rel (%p270) target = $region47
        $region44: #{tpu_custom_call.1} parent=39 // loop_body
          %s274 = sadd.s32 %s267, %s269
          %s275 = sshra.s32 %s274, 7
          %s276 = sand.u32 %s274, 127
          %s277 = sadd.s32 %s275, %s32
          %s278 = smul.u32 %s277, 128
          %s279 = sshra.s32 %s274, 7
          %s280 = sand.u32 %s274, 127
          %s281 = sadd.s32 %s278, %s280
          %s282 = sld [smem:[#allocation5 + %s281]]
          %s283 = scalar_lea.vmem %s2, %s282
          %s284 = scalar_lea.vmem [#allocation2], %s269
          %s285 = scalar_lea.sflag [#allocation3], %s269
          %p287 = scmp.lt.u32.totalorder 1, 8
          %p288 = pneg %p287
          // Predicated region
          $region48: #{tpu_custom_call.1} parent=44 // pred_check
            _
          $region49: #{tpu_custom_call.1} parent=44 // pred_check_branch
            %290 = sbr.rel (%p287) target = $region51
          $region50: #{tpu_custom_call.1} parent=44 // pred_region
            %s305 = sand.u32 1, 7
            %p306 = scmp.eq.s32.totalorder %s305, 0
            %p307 = pneg %p306
            // Predicated region
            $region63: #{tpu_custom_call.1} parent=50 // pred_check
              _
            $region64: #{tpu_custom_call.1} parent=50 // pred_check_branch
              %309 = sbr.rel (%p306) target = $region66
            $region65: #{tpu_custom_call.1} parent=50 // pred_region
              %s310 = sand.u32 1, 7
              %s311 = ssub.s32 1, %s310
              %s312 = scalar_lea.vmem %s283, %s311
              %s313 = ssub.s32 1, %s310
              %s314 = scalar_lea.vmem %s284, %s313 [#allocation2]
              %s315 = sshllo.u32 0, %s310
              loop: start=0, step=1, limit=1
              $region67: #{tpu_custom_call.1} parent=65 // loop_pre_header
                _
              $region68: #{tpu_custom_call.1} parent=65 // loop_header
                %s317 = sphi 0, %s321
                %p318 = scmp.ge.s32.totalorder %s317, 1
                %s322 = sphi %s312, %s312
                %s323 = sphi %s314, %s314
              $region69: #{tpu_custom_call.1} parent=65 // loop_header_branch
                %320 = sbr.rel (%p318) target = $region73
              $region70: #{tpu_custom_call.1} parent=65 // loop_body
                %v324 = vld [vmem:[%s322] sm:%s315]
                %325 = vst [vmem:[%s323] sm:%s315] %v324
              $region71: #{tpu_custom_call.1} parent=65 // loop_footer
                %s321 = sadd.s32 1, %s317
              $region72: #{tpu_custom_call.1} parent=65 // loop_footer_branch
                %316 = sbr.rel target = $region68
              $region73: #{tpu_custom_call.1} parent=65 // loop_exit
                _
            $region66: #{tpu_custom_call.1} parent=50 // pred_fallthru
              _
          $region51: #{tpu_custom_call.1} parent=44 // pred_fallthru
            _
          // Predicated region
          $region52: #{tpu_custom_call.1} parent=44 // pred_check
            %p291 = pneg %p287
          $region53: #{tpu_custom_call.1} parent=44 // pred_check_branch
            %293 = sbr.rel (%p291) target = $region55
          $region54: #{tpu_custom_call.1} parent=44 // pred_region
            %s294 = sshllo.u32 0, 1
            loop: start=0, step=1, limit=1
            $region56: #{tpu_custom_call.1} parent=54 // loop_pre_header
              _
            $region57: #{tpu_custom_call.1} parent=54 // loop_header
              %s296 = sphi 0, %s300
              %p297 = scmp.ge.s32.totalorder %s296, 1
              %s301 = sphi %s283, %s283
              %s302 = sphi %s284, %s284
            $region58: #{tpu_custom_call.1} parent=54 // loop_header_branch
              %299 = sbr.rel (%p297) target = $region62
            $region59: #{tpu_custom_call.1} parent=54 // loop_body
              %v303 = vld [vmem:[%s301] sm:%s294]
              %304 = vst [vmem:[%s302] sm:%s294] %v303
            $region60: #{tpu_custom_call.1} parent=54 // loop_footer
              %s300 = sadd.s32 1, %s296
            $region61: #{tpu_custom_call.1} parent=54 // loop_footer_branch
              %295 = sbr.rel target = $region57
            $region62: #{tpu_custom_call.1} parent=54 // loop_exit
              _
          $region55: #{tpu_custom_call.1} parent=44 // pred_fallthru
            _
          // Predicated region
          $region74: #{tpu_custom_call.1} parent=44 // pred_check
            _
          $region75: #{tpu_custom_call.1} parent=44 // pred_check_branch
            %328 = sbr.rel (0) target = $region77
          $region76: #{tpu_custom_call.1} parent=44 // pred_region
            %329 = vsyncadd %s285, 16
          $region77: #{tpu_custom_call.1} parent=44 // pred_fallthru
            _
        $region45: #{tpu_custom_call.1} parent=39 // loop_footer
          %s273 = sadd.s32 1, %s269
        $region46: #{tpu_custom_call.1} parent=39 // loop_footer_branch
          %268 = sbr.rel target = $region42
        $region47: #{tpu_custom_call.1} parent=39 // loop_exit
          _
        loop: start=0, step=1, limit=8
        $region78: #{tpu_custom_call.1} parent=39 // loop_pre_header
          _
        $region79: #{tpu_custom_call.1} parent=39 // loop_header
          %s331 = sphi 0, %s335
          %p332 = scmp.ge.s32.totalorder %s331, 8
        $region80: #{tpu_custom_call.1} parent=39 // loop_header_branch
          %334 = sbr.rel (%p332) target = $region84
        $region81: #{tpu_custom_call.1} parent=39 // loop_body
          %s336 = scalar_lea.sflag [#allocation3], %s331
          %s337 = smul.u32 1, 1
          %s338 = sshll.u32 %s337, 4
          %339 = dma.done %s336, %s338
        $region82: #{tpu_custom_call.1} parent=39 // loop_footer
          %s335 = sadd.s32 1, %s331
        $region83: #{tpu_custom_call.1} parent=39 // loop_footer_branch
          %330 = sbr.rel target = $region79
        $region84: #{tpu_custom_call.1} parent=39 // loop_exit
          _
        %v340 = vld [vmem:[#allocation2] sm:$0xff]
        %v341 = vld [vmem:[%s260] sm:$0xff]
        %v342 = vlaneseq
        %v343 = vand.u32 %v342, 127
        %344 = vset.pattern.permute.xlu0 0
        %345 = vperm.xlu0 %344, %v341
        %v346 = vpop.permute.xlu0 %345
        %vm347 = vcmp.eq.s32.totalorder %v343, %v346
        %v348 = vsel %vm347, 1, 0
        %v349 = vcvt.s32.f32 %v348
        %v350 = vld [vmem:[%s3] sm:$0xf]
        %vm351 = vcmask 31744
        %v353 = vsel %vm351, %v349, 0
        %vm355 = vcmask 1043456
        %v357 = vsel %vm355, %v350, 0
        %359 = vmatprep.subr.mxu0 0.0
        %360 = vmatpush1.msra.mxu0 %v357
        %361 = vmatprep.subr.mxu0 0.0
        %362 = vmatpush1.msra.mxu0 0.0
        %363 = vmatprep.subr.mxu0 0.0
        %364 = vmatpush1.msra.mxu0 0.0
        %365 = vmatprep.subr.mxu0 0.0
        %366 = vmatpush1.msra.mxu0 0.0
        %367 = vmatprep.subr.mxu0 0.0
        %368 = vmatpush1.msra.mxu0 0.0
        %369 = vmatprep.subr.mxu0 0.0
        %370 = vmatpush1.msra.mxu0 0.0
        %371 = vmatprep.subr.mxu0 0.0
        %372 = vmatpush1.msra.mxu0 0.0
        %373 = vmatprep.subr.mxu0 0.0
        %374 = vmatpush1.msra.mxu0 0.0
        %375 = vmatprep.subr.mxu0 0.0
        %376 = vmatpush1.msra.mxu0 0.0
        %377 = vmatprep.subr.mxu0 0.0
        %378 = vmatpush1.msra.mxu0 0.0
        %379 = vmatprep.subr.mxu0 0.0
        %380 = vmatpush1.msra.mxu0 0.0
        %381 = vmatprep.subr.mxu0 0.0
        %382 = vmatpush1.msra.mxu0 0.0
        %383 = vmatprep.subr.mxu0 0.0
        %384 = vmatpush1.msra.mxu0 0.0
        %385 = vmatprep.subr.mxu0 0.0
        %386 = vmatpush1.msra.mxu0 0.0
        %387 = vmatprep.subr.mxu0 0.0
        %388 = vmatpush1.msra.mxu0 0.0
        %389 = vmatprep.subr.mxu0 0.0
        %390 = vmatpush1.msra.mxu0 0.0
        %391 = vmatprep.subr.mxu0 0.0
        %392 = vmatpush1.msra.mxu0 0.0
        %393 = vmatprep.subr.mxu0 0.0
        %394 = vmatpush1.msra.mxu0 0.0
        %395 = vmatprep.subr.mxu0 0.0
        %396 = vmatpush1.msra.mxu0 0.0
        %397 = vmatprep.subr.mxu0 0.0
        %398 = vmatpush1.msra.mxu0 0.0
        %399 = vmatprep.subr.mxu0 0.0
        %400 = vmatpush1.msra.mxu0 0.0
        %401 = vmatprep.subr.mxu0 0.0
        %402 = vmatpush1.msra.mxu0 0.0
        %403 = vmatprep.subr.mxu0 0.0
        %404 = vmatpush1.msra.mxu0 0.0
        %405 = vmatprep.subr.mxu0 0.0
        %406 = vmatpush1.msra.mxu0 0.0
        %407 = vmatprep.subr.mxu0 0.0
        %408 = vmatpush1.msra.mxu0 0.0
        %409 = vmatprep.subr.mxu0 0.0
        %410 = vmatpush1.msra.mxu0 0.0
        %411 = vmatprep.subr.mxu0 0.0
        %412 = vmatpush1.msra.mxu0 0.0
        %413 = vmatprep.subr.mxu0 0.0
        %414 = vmatpush1.msra.mxu0 0.0
        %415 = vmatprep.subr.mxu0 0.0
        %416 = vmatpush1.msra.mxu0 0.0
        %417 = vmatprep.subr.mxu0 0.0
        %418 = vmatpush1.msra.mxu0 0.0
        %419 = vmatprep.subr.mxu0 0.0
        %420 = vmatpush1.msra.mxu0 0.0
        %421 = vmatprep.subr.mxu0 0.0
        %422 = vmatpush1.msra.mxu0 0.0
        %423 = vmatprep.mubr.f32.mxu0 0.0
        %424 = vmatmul.mubr.f32.gmra.mrb[0].mxu0 %v353
        %v425 = vpop.f32.mrb[0].mxu0
        %v426 = vadd.f32 0.0, %v425
        %v427 = vpop.f32.mrb[0].mxu0
        %428 = vdwg.mxu0
        %v429 = vadd.f32 %v340, %v426
        %v430 = vld [vmem:[%s265] sm:$0xff]
        %v431 = vadd.f32 %v429, %v430
        %vm432 = vcmask 261120
        %v433 = vsel %vm432, %v431, 0.0
        %434 = vadd.xlane.f32.xlu0 %v433
        %v435 = vpop.xlane.xlu0 %434
        %v436 = vrcp.pop 32.0
        %v437 = vmul.f32 %v435, %v436
        %v438 = vmul.f32 %v431, %v431
        %v439 = vsel %vm432, %v438, 0.0
        %440 = vadd.xlane.f32.xlu0 %v439
        %v441 = vpop.xlane.xlu0 %440
        %v442 = vmul.f32 %v441, %v436
        %v443 = vmul.f32 %v437, %v437
        %v444 = vsub.f32 %v442, %v443
        %v445 = vsub.f32 %v431, %v437
        %v446 = vadd.f32 %v444, 1e-05
        %v447 = vrsqrt.pop %v446
        %v448 = vmul.f32 %v445, %v447
        %v449 = vld [vmem:[%s5] sm:$0x1]
        %v451 = vlaneseq
        %v452 = vshrl.u32 %v451, 7
        %v453 = vsub.s32 0, %v452
        %v454 = vrot.slane %v449, %v453
        %v456 = vmul.f32 %v448, %v454
        %v457 = vld [vmem:[%s6] sm:$0x1]
        %v459 = vlaneseq
        %v460 = vshrl.u32 %v459, 7
        %v461 = vsub.s32 0, %v460
        %v462 = vrot.slane %v457, %v461
        %v464 = vadd.f32 %v456, %v462
        %465 = vst.msk [vmem:[%s255] sm:$0xff] %vm432, %v464
        %s466 = sand.u32 %s166, 1
        %s467 = scalar_lea.sflag [#allocation7], %s466
        %s468 = sand.u32 %s166, 1
        %s469 = smul.addr %s468, 8
        %s470 = scalar_lea.vmem [#allocation6], %s469
        // Predicated region
        $region85: #{tpu_custom_call.1} parent=39 // pred_check
          %p471 = pneg %p176
        $region86: #{tpu_custom_call.1} parent=39 // pred_check_branch
          %473 = sbr.rel (%p471) target = $region88
        $region87: #{tpu_custom_call.1} parent=39 // pred_region
          %s474 = sadd.s32 %s32, %s31
          %s476 = ssub.s32 128, 128
          %477 = vsyncadd %s467, %s476
          %s478 = smul.addr %s474, 128
          %s479 = scalar_lea.hbm %s7, %s478
          %s481 = sshll.u32 %s470, 4
          %s482 = int_to_ptr.vmem [resolvable:$true] %s481
          %484 = dma.vmem_to_hbm [thread:$0]  %s482, 128, %s479, %s467
        $region88: #{tpu_custom_call.1} parent=39 // pred_fallthru
          _
      $region40: #{tpu_custom_call.1} parent=5 // pred_fallthru
        _
      %p485 = scmp.le.s32.totalorder 2, %s22
      // Predicated region
      $region89: #{tpu_custom_call.1} parent=5 // pred_check
        %p486 = pneg %p485
      $region90: #{tpu_custom_call.1} parent=5 // pred_check_branch
        %488 = sbr.rel (%p486) target = $region92
      $region91: #{tpu_custom_call.1} parent=5 // pred_region
        %s489 = ssub.s32 %s22, 2
        // Predicated region
        $region93: #{tpu_custom_call.1} parent=91 // pred_check
          %p490 = pneg %p182
        $region94: #{tpu_custom_call.1} parent=91 // pred_check_branch
          %492 = sbr.rel (%p490) target = $region96
        $region95: #{tpu_custom_call.1} parent=91 // pred_region
          %s493 = sand.u32 %s167, 1
          %s494 = scalar_lea.sflag [#allocation7], %s493
          %s495 = sand.u32 %s167, 1
          %s496 = smul.addr %s495, 8
          %s497 = scalar_lea.vmem [#allocation6], %s496
          %498 = dma.done %s494, 128
        $region96: #{tpu_custom_call.1} parent=91 // pred_fallthru
          _
      $region92: #{tpu_custom_call.1} parent=5 // pred_fallthru
        _
    $region6: #{tpu_custom_call.1} parent=1 // loop_footer
      %s26 = sadd.s32 1, %s22
    $region7: #{tpu_custom_call.1} parent=1 // loop_footer_branch
      %21 = sbr.rel target = $region3
    $region8: #{tpu_custom_call.1} parent=1 // loop_exit
      _
    %499 = vsyncpa [#allocation7], 1
    %s500 = scalar_lea.sflag [#allocation7], 1
    %501 = vsyncpa %s500, 1
  %502 = vsyncmov [#allocation3]
  %s503 = vpop.sfrf %502
  %p504 = scmp.eq.s32.totalorder %s503, 0
  %p505 = pneg %p504
  %507 = shalt.err (%p505)
  %s508 = scalar_lea.sflag [#allocation3], 1
  %509 = vsyncmov %s508
  %s510 = vpop.sfrf %509
  %p511 = scmp.eq.s32.totalorder %s510, 0
  %p512 = pneg %p511
  %514 = shalt.err (%p512)
  %s515 = scalar_lea.sflag [#allocation3], 2
  %516 = vsyncmov %s515
  %s517 = vpop.sfrf %516
  %p518 = scmp.eq.s32.totalorder %s517, 0
  %p519 = pneg %p518
  %521 = shalt.err (%p519)
  %s522 = scalar_lea.sflag [#allocation3], 3
  %523 = vsyncmov %s522
  %s524 = vpop.sfrf %523
  %p525 = scmp.eq.s32.totalorder %s524, 0
  %p526 = pneg %p525
  %528 = shalt.err (%p526)
  %s529 = scalar_lea.sflag [#allocation3], 4
  %530 = vsyncmov %s529
  %s531 = vpop.sfrf %530
  %p532 = scmp.eq.s32.totalorder %s531, 0
  %p533 = pneg %p532
  %535 = shalt.err (%p533)
  %s536 = scalar_lea.sflag [#allocation3], 5
  %537 = vsyncmov %s536
  %s538 = vpop.sfrf %537
  %p539 = scmp.eq.s32.totalorder %s538, 0
  %p540 = pneg %p539
  %542 = shalt.err (%p540)
  %s543 = scalar_lea.sflag [#allocation3], 6
  %544 = vsyncmov %s543
  %s545 = vpop.sfrf %544
  %p546 = scmp.eq.s32.totalorder %s545, 0
  %p547 = pneg %p546
  %549 = shalt.err (%p547)
  %s550 = scalar_lea.sflag [#allocation3], 7
  %551 = vsyncmov %s550
  %s552 = vpop.sfrf %551
  %p553 = scmp.eq.s32.totalorder %s552, 0
  %p554 = pneg %p553
  %556 = shalt.err (%p554)

</llo_original>
